<compile_context>
chip_gen: v5e
topology: v5e:2x2
jax: 0.10.0
libtpu: 0.0.40
codegen_flags: <defaults>
</compile_context>

<pallas_src>
import jax
import jax.numpy as jnp
from jax.experimental import pallas as pl
from jax.experimental.pallas import tpu as pltpu

F1 = 128  # lin1 out-features 100 -> padded to 128 (the real MXU contraction dim)
F2 = 32   # lin2 out-features 25  -> padded to 32 (8-sublane multiple; row 25 carries folded b3)


def mlp_kernel(x_ref, w1_ref, b1_ref, w2_ref, b2_ref, w3_ref, o_ref):
    # x_ref: (1, tile_n) -- batch on lanes.
    x = x_ref[...]

    # lin1: in_features == 1 -> pure VPU broadcast multiply (no K=1 MXU matmul).
    h1 = jnp.maximum(w1_ref[...] * x + b1_ref[...], 0.0)                 # (F1, tile_n)

    # lin2: the only real contraction (K=100 padded to 128) -> MXU, f32 accumulate.
    h2 = jnp.dot(w2_ref[...], h1, preferred_element_type=jnp.float32) + b2_ref[...]
    h2 = jnp.maximum(h2, 0.0)                                            # (F2, tile_n)

    # lin3 (+ folded b3): small K=F2 contraction on the MXU (idle after lin2);
    # result stays lane-dense (1, tile_n) so stores are unmasked full-lane vst.
    out = jnp.dot(w3_ref[...], h2, preferred_element_type=jnp.float32)   # (1, tile_n)
    o_ref[...] = out.astype(o_ref.dtype)


def pack_params(p):
    """One-time repack (hoisted out of the hot path) into the kernel's layout.

    Zero padding everywhere so padded feature rows contribute exactly 0 through both
    ReLUs.  b3 is folded into lin3: b2[25] = 1 makes h2[25,:] == relu(0 + 1) == 1
    (w2 row 25 is all zeros), and w3[0,25] = b3 carries the bias through the dot.
    """
    w1 = jnp.zeros((F1, 1), jnp.float32).at[:100, :].set(p["w1"].T)      # (100,1) col
    b1 = jnp.zeros((F1, 1), jnp.float32).at[:100, 0].set(p["b1"][0])
    w2 = jnp.zeros((F2, F1), jnp.float32).at[:25, :100].set(p["w2"].T)   # (25,100)
    b2 = (jnp.zeros((F2, 1), jnp.float32)
          .at[:25, 0].set(p["b2"][0])
          .at[25, 0].set(1.0))                                           # bias-carrier row
    w3 = (jnp.zeros((1, F2), jnp.float32)
          .at[0, :25].set(p["w3"][:, 0])
          .at[0, 25].set(p["b3"][0, 0]))                                 # folded b3
    return w1, b1, w2, b2, w3


def _round_up(a, b):
    return ((a + b - 1) // b) * b


@jax.jit
def net_forward(x, packed):
    """x: (N, 1) float32 (PyTorch layout). packed = pack_params(params). Returns (N, 1)."""
    w1, b1, w2, b2, w3 = packed
    N = x.shape[0]

    # One big lane-dense grid step unless the batch is huge: per-step overhead is
    # ~0.35 us and the weights are grid-invariant, so splitting (and engaging v7x's
    # second TensorCore) only pays when each step still carries >= 8192 lanes.
    Np0 = _round_up(N, 128)
    tile_n = Np0 if Np0 <= 8192 else 8192
    Np = _round_up(N, tile_n)
    grid = (Np // tile_n,)

    # Batch onto lanes: (N, 1) -> (1, Np), zero-padded tail (sliced off below).
    # Under jit this pad and the final slice fuse around the pallas_call.
    x_row = jnp.zeros((1, Np), jnp.float32).at[0, :N].set(x[:, 0])

    # Grid-invariant operands: constant block index -> no re-DMA between steps.
    const = lambda arr: pl.BlockSpec(arr.shape, lambda i: (0, 0))

    out_row = pl.pallas_call(
        mlp_kernel,
        out_shape=jax.ShapeDtypeStruct((1, Np), x.dtype),
        grid=grid,
        in_specs=[
            pl.BlockSpec((1, tile_n), lambda i: (0, i)),              # x tile (lane-dense)
            const(w1), const(b1), const(w2), const(b2), const(w3),
        ],
        out_specs=pl.BlockSpec((1, tile_n), lambda i: (0, i)),        # lane-dense output
        compiler_params=pltpu.CompilerParams(
            dimension_semantics=("parallel",),
            vmem_limit_bytes=32 * 1024 * 1024,
        ),
    )(x_row, w1, b1, w2, b2, w3)

    return out_row[0, :N].reshape(N, 1)


def init_params(key):
    """Deterministic init with shapes implied by Net (Linear(1,100), Linear(100,25), Linear(25,1))."""
    k1, k2, k3, k4, k5, k6 = jax.random.split(key, 6)

    def uinit(k, shape, fan_in):
        bound = 1.0 / jnp.sqrt(fan_in)
        return jax.random.uniform(k, shape, jnp.float32, -bound, bound)

    return {
        "w1": uinit(k1, (1, 100), 1.0),
        "b1": uinit(k2, (1, 100), 1.0),
        "w2": uinit(k3, (100, 25), 100.0),
        "b2": uinit(k4, (1, 25), 100.0),
        "w3": uinit(k5, (25, 1), 25.0),
        "b3": uinit(k6, (1, 1), 25.0),
    }


def net_forward_ref(x, p):
    h1 = jnp.maximum(x @ p["w1"] + p["b1"], 0.0)
    h2 = jnp.maximum(h1 @ p["w2"] + p["b2"], 0.0)
    return h2 @ p["w3"] + p["b3"]


if __name__ == "__main__":
    key = jax.random.PRNGKey(0)
    params = init_params(key)

    # Pack once at init (hoisted out of the forward path per perf review).
    packed = jax.tree.map(jax.block_until_ready, pack_params(params))

    # Sine-generator input from the spec: 2 s * 200 Hz = 400 samples of a 1-D coordinate.
    signal_duration = 2
    sampling_freq = 200
    N = signal_duration * sampling_freq
    t = jnp.linspace(0.0, signal_duration * 2.0 * jnp.pi, N, dtype=jnp.float32)
    x = t.reshape(N, 1)

    out = net_forward(x, packed)
    out = jax.block_until_ready(out)

    ref = net_forward_ref(x, params)
    assert out.shape == (N, 1)
    assert jnp.allclose(out, ref, atol=1e-4, rtol=1e-4), float(jnp.max(jnp.abs(out - ref)))

    print("KERNEL_OK")
</pallas_src>

<mosaic_0001>
module attributes {stable_mosaic.version = 11 : i64} {
  func.func @mlp_kernel(%arg0: i32, %arg1: memref<1x512xf32, #tpu.memory_space<vmem>>, %arg2: memref<128x1xf32, #tpu.memory_space<vmem>>, %arg3: memref<128x1xf32, #tpu.memory_space<vmem>>, %arg4: memref<32x128xf32, #tpu.memory_space<vmem>>, %arg5: memref<32x1xf32, #tpu.memory_space<vmem>>, %arg6: memref<1x32xf32, #tpu.memory_space<vmem>>, %arg7: memref<1x512xf32, #tpu.memory_space<vmem>>) attributes {dimension_semantics = [#tpu.dimension_semantics<parallel>], iteration_bounds = array<i64: 1>, scalar_prefetch = 0 : i64, scratch_operands = 0 : i64, tpu.core_type = #tpu.core_type<tc>, window_params = [{transform_indices = @transform_0, window_bounds = array<i64: 1, 512>}, {pipeline_mode = #tpu.pipeline_mode<synchronous>, transform_indices = @transform_1, window_bounds = array<i64: 128, 1>}, {pipeline_mode = #tpu.pipeline_mode<synchronous>, transform_indices = @transform_2, window_bounds = array<i64: 128, 1>}, {pipeline_mode = #tpu.pipeline_mode<synchronous>, transform_indices = @transform_3, window_bounds = array<i64: 32, 128>}, {pipeline_mode = #tpu.pipeline_mode<synchronous>, transform_indices = @transform_4, window_bounds = array<i64: 32, 1>}, {pipeline_mode = #tpu.pipeline_mode<synchronous>, transform_indices = @transform_5, window_bounds = array<i64: 1, 32>}, {transform_indices = @transform_6, window_bounds = array<i64: 1, 512>}]} {
    %c0 = arith.constant 0 : index
    %c0_0 = arith.constant 0 : index
    %0 = vector.load %arg1[%c0, %c0_0] : memref<1x512xf32, #tpu.memory_space<vmem>>, vector<1x512xf32>
    %c0_1 = arith.constant 0 : index
    %c0_2 = arith.constant 0 : index
    %1 = vector.load %arg2[%c0_1, %c0_2] : memref<128x1xf32, #tpu.memory_space<vmem>>, vector<128x1xf32>
    %2 = vector.broadcast %1 : vector<128x1xf32> to vector<128x512xf32>
    %3 = vector.broadcast %0 : vector<1x512xf32> to vector<128x512xf32>
    %4 = arith.mulf %2, %3 : vector<128x512xf32>
    %c0_3 = arith.constant 0 : index
    %c0_4 = arith.constant 0 : index
    %5 = vector.load %arg3[%c0_3, %c0_4] : memref<128x1xf32, #tpu.memory_space<vmem>>, vector<128x1xf32>
    %6 = vector.broadcast %5 : vector<128x1xf32> to vector<128x512xf32>
    %7 = arith.addf %4, %6 : vector<128x512xf32>
    %cst = arith.constant 0.000000e+00 : f32
    %8 = vector.broadcast %cst : f32 to vector<128x512xf32>
    %9 = arith.maximumf %7, %8 : vector<128x512xf32>
    %c0_5 = arith.constant 0 : index
    %c0_6 = arith.constant 0 : index
    %10 = vector.load %arg4[%c0_5, %c0_6] : memref<32x128xf32, #tpu.memory_space<vmem>>, vector<32x128xf32>
    %cst_7 = arith.constant dense<0.000000e+00> : vector<32x512xf32>
    %11 = tpu.matmul %10, %9, %cst_7 {dimension_numbers = #tpu.dot_dimension_numbers<[1], [0], [0], [1], [0, 0, 1, 1], [], []>} : vector<32x128xf32>, vector<128x512xf32>, vector<32x512xf32> -> vector<32x512xf32>
    %c0_8 = arith.constant 0 : index
    %c0_9 = arith.constant 0 : index
    %12 = vector.load %arg5[%c0_8, %c0_9] : memref<32x1xf32, #tpu.memory_space<vmem>>, vector<32x1xf32>
    %13 = vector.broadcast %12 : vector<32x1xf32> to vector<32x512xf32>
    %14 = arith.addf %11, %13 : vector<32x512xf32>
    %cst_10 = arith.constant 0.000000e+00 : f32
    %15 = vector.broadcast %cst_10 : f32 to vector<32x512xf32>
    %16 = arith.maximumf %14, %15 : vector<32x512xf32>
    %c0_11 = arith.constant 0 : index
    %c0_12 = arith.constant 0 : index
    %17 = vector.load %arg6[%c0_11, %c0_12] : memref<1x32xf32, #tpu.memory_space<vmem>>, vector<1x32xf32>
    %cst_13 = arith.constant dense<0.000000e+00> : vector<1x512xf32>
    %18 = tpu.matmul %17, %16, %cst_13 {dimension_numbers = #tpu.dot_dimension_numbers<[1], [0], [0], [1], [0, 0, 1, 1], [], []>} : vector<1x32xf32>, vector<32x512xf32>, vector<1x512xf32> -> vector<1x512xf32>
    %c0_14 = arith.constant 0 : index
    %c0_15 = arith.constant 0 : index
    %19 = vector.load %arg7[%c0_14, %c0_15] : memref<1x512xf32, #tpu.memory_space<vmem>>, vector<1x512xf32>
    tpu.vector_store %arg7[%c0_14, %c0_15], %18 {strides = array<i32>} : memref<1x512xf32, #tpu.memory_space<vmem>>, vector<1x512xf32>,
    return
  }
  func.func @transform_0(%arg0: i32) -> (i32, i32) {
    %c0_i32 = arith.constant 0 : i32
    %c0_i32_0 = arith.constant 0 : i32
    return %c0_i32, %arg0 : i32, i32
  }
  func.func @transform_1(%arg0: i32) -> (i32, i32) {
    %c0_i32 = arith.constant 0 : i32
    %c0_i32_0 = arith.constant 0 : i32
    %c0_i32_1 = arith.constant 0 : i32
    return %c0_i32, %c0_i32_0 : i32, i32
  }
  func.func @transform_2(%arg0: i32) -> (i32, i32) {
    %c0_i32 = arith.constant 0 : i32
    %c0_i32_0 = arith.constant 0 : i32
    %c0_i32_1 = arith.constant 0 : i32
    return %c0_i32, %c0_i32_0 : i32, i32
  }
  func.func @transform_3(%arg0: i32) -> (i32, i32) {
    %c0_i32 = arith.constant 0 : i32
    %c0_i32_0 = arith.constant 0 : i32
    %c0_i32_1 = arith.constant 0 : i32
    return %c0_i32, %c0_i32_0 : i32, i32
  }
  func.func @transform_4(%arg0: i32) -> (i32, i32) {
    %c0_i32 = arith.constant 0 : i32
    %c0_i32_0 = arith.constant 0 : i32
    %c0_i32_1 = arith.constant 0 : i32
    return %c0_i32, %c0_i32_0 : i32, i32
  }
  func.func @transform_5(%arg0: i32) -> (i32, i32) {
    %c0_i32 = arith.constant 0 : i32
    %c0_i32_0 = arith.constant 0 : i32
    %c0_i32_1 = arith.constant 0 : i32
    return %c0_i32, %c0_i32_0 : i32, i32
  }
  func.func @transform_6(%arg0: i32) -> (i32, i32) {
    %c0_i32 = arith.constant 0 : i32
    %c0_i32_0 = arith.constant 0 : i32
    return %c0_i32, %arg0 : i32, i32
  }
}

</mosaic_0001>

<llo_original>
// kernel: net_forward.1
$region0: #{net_forward.1}
  #allocation0 [shape = 'u32[]', space=smem, size = 0x4, offset = 0x4, fixed_abs, tag = 'smem constant byte address 0x4 - core index']
  #allocation1 [shape = 'u32[72,128]{1,0:T(1,128)}', space=vmem, size = 0x9000, scoped, tag = 'internal scratch']
  %s0 = inlined_call_operand.vmem [shape: f32[1,512], index: 0, kind: input, shape index: {}]
  %s1 = inlined_call_operand.vmem [shape: f32[128,1], index: 1, kind: input, shape index: {}]
  %s2 = inlined_call_operand.vmem [shape: f32[128,1], index: 2, kind: input, shape index: {}]
  %s3 = inlined_call_operand.vmem [shape: f32[32,128], index: 3, kind: input, shape index: {}]
  %s4 = inlined_call_operand.vmem [shape: f32[32,1], index: 4, kind: input, shape index: {}]
  %s5 = inlined_call_operand.vmem [shape: f32[1,32], index: 5, kind: input, shape index: {}]
  %s6 = inlined_call_operand.vmem [shape: f32[1,512], index: 6, kind: output, shape index: {}]
  %s7 = sld [smem:[#allocation0]]
  $region34: #{net_forward.1} parent=0
    _
  %s9 = ssub.s32 1, %s7
  %s10 = scalar_select 0, %s9, %s7
  // Predicated region
  $region2: #{net_forward.1} parent=0 // pred_check
    _
  $region3: #{net_forward.1} parent=0 // pred_check_branch
    %12 = sbr.rel (0) target = $region5
  $region4: #{net_forward.1} parent=0 // pred_region
    _
  $region5: #{net_forward.1} parent=0 // pred_fallthru
    _
  // Predicated region
  $region6: #{net_forward.1} parent=0 // pred_check
    _
  $region7: #{net_forward.1} parent=0 // pred_check_branch
    %14 = sbr.rel (0) target = $region9
  $region8: #{net_forward.1} parent=0 // pred_region
    _
  $region9: #{net_forward.1} parent=0 // pred_fallthru
    _
  // Predicated region
  $region10: #{net_forward.1} parent=0 // pred_check
    _
  $region11: #{net_forward.1} parent=0 // pred_check_branch
    %16 = sbr.rel (0) target = $region13
  $region12: #{net_forward.1} parent=0 // pred_region
    _
  $region13: #{net_forward.1} parent=0 // pred_fallthru
    _
  // Predicated region
  $region14: #{net_forward.1} parent=0 // pred_check
    _
  $region15: #{net_forward.1} parent=0 // pred_check_branch
    %18 = sbr.rel (0) target = $region17
  $region16: #{net_forward.1} parent=0 // pred_region
    _
  $region17: #{net_forward.1} parent=0 // pred_fallthru
    _
  // Predicated region
  $region18: #{net_forward.1} parent=0 // pred_check
    _
  $region19: #{net_forward.1} parent=0 // pred_check_branch
    %20 = sbr.rel (0) target = $region21
  $region20: #{net_forward.1} parent=0 // pred_region
    _
  $region21: #{net_forward.1} parent=0 // pred_fallthru
    _
  // Predicated region
  $region22: #{net_forward.1} parent=0 // pred_check
    _
  $region23: #{net_forward.1} parent=0 // pred_check_branch
    %22 = sbr.rel (0) target = $region25
  $region24: #{net_forward.1} parent=0 // pred_region
    _
  $region25: #{net_forward.1} parent=0 // pred_fallthru
    _
  %v23 = vld [vmem:[%s0] sm:$0xf]
  %v24 = vld [vmem:[%s1] sm:$0xff]
  %v25 = vld [vmem:[%s1 + $0x8] sm:$0xff]
  %v26 = vld [vmem:[%s1 + $0x10] sm:$0xff]
  %v27 = vld [vmem:[%s1 + $0x18] sm:$0xff]
  %v28 = vld [vmem:[%s1 + $0x20] sm:$0xff]
  %v29 = vld [vmem:[%s1 + $0x28] sm:$0xff]
  %v30 = vld [vmem:[%s1 + $0x30] sm:$0xff]
  %v31 = vld [vmem:[%s1 + $0x38] sm:$0xff]
  %v32 = vld [vmem:[%s1 + $0x40] sm:$0xff]
  %v33 = vld [vmem:[%s1 + $0x48] sm:$0xff]
  %v34 = vld [vmem:[%s1 + $0x50] sm:$0xff]
  %v35 = vld [vmem:[%s1 + $0x58] sm:$0xff]
  %v36 = vld [vmem:[%s1 + $0x60] sm:$0xff]
  %v37 = vld [vmem:[%s1 + $0x68] sm:$0xff]
  %v38 = vld [vmem:[%s1 + $0x70] sm:$0xff]
  %v39 = vld [vmem:[%s1 + $0x78] sm:$0xff]
  %41 = vset.pattern.permute.xlu0 0
  %42 = vperm.xlu0 %41, %v24
  %v43 = vpop.permute.xlu0 %42
  %46 = vset.pattern.permute.xlu0 0
  %47 = vperm.xlu0 %46, %v25
  %v48 = vpop.permute.xlu0 %47
  %51 = vset.pattern.permute.xlu0 0
  %52 = vperm.xlu0 %51, %v26
  %v53 = vpop.permute.xlu0 %52
  %56 = vset.pattern.permute.xlu0 0
  %57 = vperm.xlu0 %56, %v27
  %v58 = vpop.permute.xlu0 %57
  %61 = vset.pattern.permute.xlu0 0
  %62 = vperm.xlu0 %61, %v28
  %v63 = vpop.permute.xlu0 %62
  %66 = vset.pattern.permute.xlu0 0
  %67 = vperm.xlu0 %66, %v29
  %v68 = vpop.permute.xlu0 %67
  %71 = vset.pattern.permute.xlu0 0
  %72 = vperm.xlu0 %71, %v30
  %v73 = vpop.permute.xlu0 %72
  %76 = vset.pattern.permute.xlu0 0
  %77 = vperm.xlu0 %76, %v31
  %v78 = vpop.permute.xlu0 %77
  %81 = vset.pattern.permute.xlu0 0
  %82 = vperm.xlu0 %81, %v32
  %v83 = vpop.permute.xlu0 %82
  %86 = vset.pattern.permute.xlu0 0
  %87 = vperm.xlu0 %86, %v33
  %v88 = vpop.permute.xlu0 %87
  %91 = vset.pattern.permute.xlu0 0
  %92 = vperm.xlu0 %91, %v34
  %v93 = vpop.permute.xlu0 %92
  %96 = vset.pattern.permute.xlu0 0
  %97 = vperm.xlu0 %96, %v35
  %v98 = vpop.permute.xlu0 %97
  %101 = vset.pattern.permute.xlu0 0
  %102 = vperm.xlu0 %101, %v36
  %v103 = vpop.permute.xlu0 %102
  %106 = vset.pattern.permute.xlu0 0
  %107 = vperm.xlu0 %106, %v37
  %v108 = vpop.permute.xlu0 %107
  %111 = vset.pattern.permute.xlu0 0
  %112 = vperm.xlu0 %111, %v38
  %v113 = vpop.permute.xlu0 %112
  %116 = vset.pattern.permute.xlu0 0
  %117 = vperm.xlu0 %116, %v39
  %v118 = vpop.permute.xlu0 %117
  %v121 = vperm.slane %v23, 0
  %v122 = vperm.slane %v23, 1
  %v123 = vperm.slane %v23, 2
  %v124 = vperm.slane %v23, 3
  %v129 = vmul.f32 %v43, %v121
  %v130 = vmul.f32 %v43, %v122
  %v131 = vmul.f32 %v43, %v123
  %v132 = vmul.f32 %v43, %v124
  %v133 = vmul.f32 %v48, %v121
  %v134 = vmul.f32 %v48, %v122
  %v135 = vmul.f32 %v48, %v123
  %v136 = vmul.f32 %v48, %v124
  %v137 = vmul.f32 %v53, %v121
  %v138 = vmul.f32 %v53, %v122
  %v139 = vmul.f32 %v53, %v123
  %v140 = vmul.f32 %v53, %v124
  %v141 = vmul.f32 %v58, %v121
  %v142 = vmul.f32 %v58, %v122
  %v143 = vmul.f32 %v58, %v123
  %v144 = vmul.f32 %v58, %v124
  %v145 = vmul.f32 %v63, %v121
  %v146 = vmul.f32 %v63, %v122
  %v147 = vmul.f32 %v63, %v123
  %v148 = vmul.f32 %v63, %v124
  %v149 = vmul.f32 %v68, %v121
  %v150 = vmul.f32 %v68, %v122
  %v151 = vmul.f32 %v68, %v123
  %v152 = vmul.f32 %v68, %v124
  %v153 = vmul.f32 %v73, %v121
  %v154 = vmul.f32 %v73, %v122
  %v155 = vmul.f32 %v73, %v123
  %v156 = vmul.f32 %v73, %v124
  %v157 = vmul.f32 %v78, %v121
  %v158 = vmul.f32 %v78, %v122
  %v159 = vmul.f32 %v78, %v123
  %v160 = vmul.f32 %v78, %v124
  %v161 = vmul.f32 %v83, %v121
  %v162 = vmul.f32 %v83, %v122
  %v163 = vmul.f32 %v83, %v123
  %v164 = vmul.f32 %v83, %v124
  %v165 = vmul.f32 %v88, %v121
  %v166 = vmul.f32 %v88, %v122
  %v167 = vmul.f32 %v88, %v123
  %v168 = vmul.f32 %v88, %v124
  %v169 = vmul.f32 %v93, %v121
  %v170 = vmul.f32 %v93, %v122
  %v171 = vmul.f32 %v93, %v123
  %v172 = vmul.f32 %v93, %v124
  %v173 = vmul.f32 %v98, %v121
  %v174 = vmul.f32 %v98, %v122
  %v175 = vmul.f32 %v98, %v123
  %v176 = vmul.f32 %v98, %v124
  %v177 = vmul.f32 %v103, %v121
  %v178 = vmul.f32 %v103, %v122
  %v179 = vmul.f32 %v103, %v123
  %v180 = vmul.f32 %v103, %v124
  %v181 = vmul.f32 %v108, %v121
  %v182 = vmul.f32 %v108, %v122
  %v183 = vmul.f32 %v108, %v123
  %v184 = vmul.f32 %v108, %v124
  %v185 = vmul.f32 %v113, %v121
  %v186 = vmul.f32 %v113, %v122
  %v187 = vmul.f32 %v113, %v123
  %v188 = vmul.f32 %v113, %v124
  %v189 = vmul.f32 %v118, %v121
  %v190 = vmul.f32 %v118, %v122
  %v191 = vmul.f32 %v118, %v123
  %v192 = vmul.f32 %v118, %v124
  %v193 = vld [vmem:[%s2] sm:$0xff]
  %v194 = vld [vmem:[%s2 + $0x8] sm:$0xff]
  %v195 = vld [vmem:[%s2 + $0x10] sm:$0xff]
  %v196 = vld [vmem:[%s2 + $0x18] sm:$0xff]
  %v197 = vld [vmem:[%s2 + $0x20] sm:$0xff]
  %v198 = vld [vmem:[%s2 + $0x28] sm:$0xff]
  %v199 = vld [vmem:[%s2 + $0x30] sm:$0xff]
  %v200 = vld [vmem:[%s2 + $0x38] sm:$0xff]
  %v201 = vld [vmem:[%s2 + $0x40] sm:$0xff]
  %v202 = vld [vmem:[%s2 + $0x48] sm:$0xff]
  %v203 = vld [vmem:[%s2 + $0x50] sm:$0xff]
  %v204 = vld [vmem:[%s2 + $0x58] sm:$0xff]
  %v205 = vld [vmem:[%s2 + $0x60] sm:$0xff]
  %v206 = vld [vmem:[%s2 + $0x68] sm:$0xff]
  %v207 = vld [vmem:[%s2 + $0x70] sm:$0xff]
  %v208 = vld [vmem:[%s2 + $0x78] sm:$0xff]
  %210 = vset.pattern.permute.xlu0 0
  %211 = vperm.xlu0 %210, %v193
  %v212 = vpop.permute.xlu0 %211
  %215 = vset.pattern.permute.xlu0 0
  %216 = vperm.xlu0 %215, %v194
  %v217 = vpop.permute.xlu0 %216
  %220 = vset.pattern.permute.xlu0 0
  %221 = vperm.xlu0 %220, %v195
  %v222 = vpop.permute.xlu0 %221
  %225 = vset.pattern.permute.xlu0 0
  %226 = vperm.xlu0 %225, %v196
  %v227 = vpop.permute.xlu0 %226
  %230 = vset.pattern.permute.xlu0 0
  %231 = vperm.xlu0 %230, %v197
  %v232 = vpop.permute.xlu0 %231
  %235 = vset.pattern.permute.xlu0 0
  %236 = vperm.xlu0 %235, %v198
  %v237 = vpop.permute.xlu0 %236
  %240 = vset.pattern.permute.xlu0 0
  %241 = vperm.xlu0 %240, %v199
  %v242 = vpop.permute.xlu0 %241
  %245 = vset.pattern.permute.xlu0 0
  %246 = vperm.xlu0 %245, %v200
  %v247 = vpop.permute.xlu0 %246
  %250 = vset.pattern.permute.xlu0 0
  %251 = vperm.xlu0 %250, %v201
  %v252 = vpop.permute.xlu0 %251
  %255 = vset.pattern.permute.xlu0 0
  %256 = vperm.xlu0 %255, %v202
  %v257 = vpop.permute.xlu0 %256
  %260 = vset.pattern.permute.xlu0 0
  %261 = vperm.xlu0 %260, %v203
  %v262 = vpop.permute.xlu0 %261
  %265 = vset.pattern.permute.xlu0 0
  %266 = vperm.xlu0 %265, %v204
  %v267 = vpop.permute.xlu0 %266
  %270 = vset.pattern.permute.xlu0 0
  %271 = vperm.xlu0 %270, %v205
  %v272 = vpop.permute.xlu0 %271
  %275 = vset.pattern.permute.xlu0 0
  %276 = vperm.xlu0 %275, %v206
  %v277 = vpop.permute.xlu0 %276
  %280 = vset.pattern.permute.xlu0 0
  %281 = vperm.xlu0 %280, %v207
  %v282 = vpop.permute.xlu0 %281
  %285 = vset.pattern.permute.xlu0 0
  %286 = vperm.xlu0 %285, %v208
  %v287 = vpop.permute.xlu0 %286
  %v289 = vadd.f32 %v129, %v212
  %v290 = vadd.f32 %v130, %v212
  %v291 = vadd.f32 %v131, %v212
  %v292 = vadd.f32 %v132, %v212
  %v293 = vadd.f32 %v133, %v217
  %v294 = vadd.f32 %v134, %v217
  %v295 = vadd.f32 %v135, %v217
  %v296 = vadd.f32 %v136, %v217
  %v297 = vadd.f32 %v137, %v222
  %v298 = vadd.f32 %v138, %v222
  %v299 = vadd.f32 %v139, %v222
  %v300 = vadd.f32 %v140, %v222
  %v301 = vadd.f32 %v141, %v227
  %v302 = vadd.f32 %v142, %v227
  %v303 = vadd.f32 %v143, %v227
  %v304 = vadd.f32 %v144, %v227
  %v305 = vadd.f32 %v145, %v232
  %v306 = vadd.f32 %v146, %v232
  %v307 = vadd.f32 %v147, %v232
  %v308 = vadd.f32 %v148, %v232
  %v309 = vadd.f32 %v149, %v237
  %v310 = vadd.f32 %v150, %v237
  %v311 = vadd.f32 %v151, %v237
  %v312 = vadd.f32 %v152, %v237
  %v313 = vadd.f32 %v153, %v242
  %v314 = vadd.f32 %v154, %v242
  %v315 = vadd.f32 %v155, %v242
  %v316 = vadd.f32 %v156, %v242
  %v317 = vadd.f32 %v157, %v247
  %v318 = vadd.f32 %v158, %v247
  %v319 = vadd.f32 %v159, %v247
  %v320 = vadd.f32 %v160, %v247
  %v321 = vadd.f32 %v161, %v252
  %v322 = vadd.f32 %v162, %v252
  %v323 = vadd.f32 %v163, %v252
  %v324 = vadd.f32 %v164, %v252
  %v325 = vadd.f32 %v165, %v257
  %v326 = vadd.f32 %v166, %v257
  %v327 = vadd.f32 %v167, %v257
  %v328 = vadd.f32 %v168, %v257
  %v329 = vadd.f32 %v169, %v262
  %v330 = vadd.f32 %v170, %v262
  %v331 = vadd.f32 %v171, %v262
  %v332 = vadd.f32 %v172, %v262
  %v333 = vadd.f32 %v173, %v267
  %v334 = vadd.f32 %v174, %v267
  %v335 = vadd.f32 %v175, %v267
  %v336 = vadd.f32 %v176, %v267
  %v337 = vadd.f32 %v177, %v272
  %v338 = vadd.f32 %v178, %v272
  %v339 = vadd.f32 %v179, %v272
  %v340 = vadd.f32 %v180, %v272
  %v341 = vadd.f32 %v181, %v277
  %v342 = vadd.f32 %v182, %v277
  %v343 = vadd.f32 %v183, %v277
  %v344 = vadd.f32 %v184, %v277
  %v345 = vadd.f32 %v185, %v282
  %v346 = vadd.f32 %v186, %v282
  %v347 = vadd.f32 %v187, %v282
  %v348 = vadd.f32 %v188, %v282
  %v349 = vadd.f32 %v189, %v287
  %v350 = vadd.f32 %v190, %v287
  %v351 = vadd.f32 %v191, %v287
  %v352 = vadd.f32 %v192, %v287
  %v353 = vmax.f32 %v289, 0.0
  %v354 = vmax.f32 %v290, 0.0
  %v355 = vmax.f32 %v291, 0.0
  %v356 = vmax.f32 %v292, 0.0
  %v357 = vmax.f32 %v293, 0.0
  %v358 = vmax.f32 %v294, 0.0
  %v359 = vmax.f32 %v295, 0.0
  %v360 = vmax.f32 %v296, 0.0
  %v361 = vmax.f32 %v297, 0.0
  %v362 = vmax.f32 %v298, 0.0
  %v363 = vmax.f32 %v299, 0.0
  %v364 = vmax.f32 %v300, 0.0
  %v365 = vmax.f32 %v301, 0.0
  %v366 = vmax.f32 %v302, 0.0
  %v367 = vmax.f32 %v303, 0.0
  %v368 = vmax.f32 %v304, 0.0
  %v369 = vmax.f32 %v305, 0.0
  %v370 = vmax.f32 %v306, 0.0
  %v371 = vmax.f32 %v307, 0.0
  %v372 = vmax.f32 %v308, 0.0
  %v373 = vmax.f32 %v309, 0.0
  %v374 = vmax.f32 %v310, 0.0
  %v375 = vmax.f32 %v311, 0.0
  %v376 = vmax.f32 %v312, 0.0
  %v377 = vmax.f32 %v313, 0.0
  %v378 = vmax.f32 %v314, 0.0
  %v379 = vmax.f32 %v315, 0.0
  %v380 = vmax.f32 %v316, 0.0
  %v381 = vmax.f32 %v317, 0.0
  %v382 = vmax.f32 %v318, 0.0
  %v383 = vmax.f32 %v319, 0.0
  %v384 = vmax.f32 %v320, 0.0
  %v385 = vmax.f32 %v321, 0.0
  %v386 = vmax.f32 %v322, 0.0
  %v387 = vmax.f32 %v323, 0.0
  %v388 = vmax.f32 %v324, 0.0
  %v389 = vmax.f32 %v325, 0.0
  %v390 = vmax.f32 %v326, 0.0
  %v391 = vmax.f32 %v327, 0.0
  %v392 = vmax.f32 %v328, 0.0
  %v393 = vmax.f32 %v329, 0.0
  %v394 = vmax.f32 %v330, 0.0
  %v395 = vmax.f32 %v331, 0.0
  %v396 = vmax.f32 %v332, 0.0
  %v397 = vmax.f32 %v333, 0.0
  %v398 = vmax.f32 %v334, 0.0
  %v399 = vmax.f32 %v335, 0.0
  %v400 = vmax.f32 %v336, 0.0
  %v401 = vmax.f32 %v337, 0.0
  %v402 = vmax.f32 %v338, 0.0
  %v403 = vmax.f32 %v339, 0.0
  %v404 = vmax.f32 %v340, 0.0
  %v405 = vmax.f32 %v341, 0.0
  %v406 = vmax.f32 %v342, 0.0
  %v407 = vmax.f32 %v343, 0.0
  %v408 = vmax.f32 %v344, 0.0
  %v409 = vmax.f32 %v345, 0.0
  %v410 = vmax.f32 %v346, 0.0
  %v411 = vmax.f32 %v347, 0.0
  %v412 = vmax.f32 %v348, 0.0
  %v413 = vmax.f32 %v349, 0.0
  %v414 = vmax.f32 %v350, 0.0
  %v415 = vmax.f32 %v351, 0.0
  %v416 = vmax.f32 %v352, 0.0
  %v417 = vld [vmem:[%s3] sm:$0xff]
  %v418 = vld [vmem:[%s3 + $0x8] sm:$0xff]
  %v419 = vld [vmem:[%s3 + $0x10] sm:$0xff]
  %v420 = vld [vmem:[%s3 + $0x18] sm:$0xff]
  %v421 = vld [vmem:[%s4] sm:$0xff]
  %v422 = vld [vmem:[%s4 + $0x8] sm:$0xff]
  %v423 = vld [vmem:[%s4 + $0x10] sm:$0xff]
  %v424 = vld [vmem:[%s4 + $0x18] sm:$0xff]
  %426 = vset.pattern.permute.xlu0 0
  %427 = vperm.xlu0 %426, %v421
  %v428 = vpop.permute.xlu0 %427
  %431 = vset.pattern.permute.xlu0 0
  %432 = vperm.xlu0 %431, %v422
  %v433 = vpop.permute.xlu0 %432
  %436 = vset.pattern.permute.xlu0 0
  %437 = vperm.xlu0 %436, %v423
  %v438 = vpop.permute.xlu0 %437
  %441 = vset.pattern.permute.xlu0 0
  %442 = vperm.xlu0 %441, %v424
  %v443 = vpop.permute.xlu0 %442
  %445 = vmatpush.msra.mxu0 %v413
  %446 = vmatpush.msra.mxu0 %v409
  %447 = vmatpush.msra.mxu0 %v405
  %448 = vmatpush.msra.mxu0 %v401
  %449 = vmatpush.msra.mxu0 %v397
  %450 = vmatpush.msra.mxu0 %v393
  %451 = vmatpush.msra.mxu0 %v389
  %452 = vmatpush.msra.mxu0 %v385
  %453 = vmatpush.msra.mxu0 %v381
  %454 = vmatpush.msra.mxu0 %v377
  %455 = vmatpush.msra.mxu0 %v373
  %456 = vmatpush.msra.mxu0 %v369
  %457 = vmatpush.msra.mxu0 %v365
  %458 = vmatpush.msra.mxu0 %v361
  %459 = vmatpush.msra.mxu0 %v357
  %460 = vmatpush.msra.mxu0 %v353
  %461 = vmatmul.f32.gmra.mxu0 %v417
  %v462 = vpop.f32.mrf.mxu0
  %v463 = vadd.f32 %v428, %v462
  %464 = vmatmul.f32.gmra.mxu0 %v418
  %v465 = vpop.f32.mrf.mxu0
  %v466 = vadd.f32 %v433, %v465
  %467 = vmatmul.f32.gmra.mxu0 %v419
  %v468 = vpop.f32.mrf.mxu0
  %v469 = vadd.f32 %v438, %v468
  %470 = vmatmul.f32.gmra.mxu0 %v420
  %v471 = vpop.f32.mrf.mxu0
  %v472 = vadd.f32 %v443, %v471
  %473 = vdwg.mxu0
  %474 = vmatpush.msra.mxu0 %v414
  %475 = vmatpush.msra.mxu0 %v410
  %476 = vmatpush.msra.mxu0 %v406
  %477 = vmatpush.msra.mxu0 %v402
  %478 = vmatpush.msra.mxu0 %v398
  %479 = vmatpush.msra.mxu0 %v394
  %480 = vmatpush.msra.mxu0 %v390
  %481 = vmatpush.msra.mxu0 %v386
  %482 = vmatpush.msra.mxu0 %v382
  %483 = vmatpush.msra.mxu0 %v378
  %484 = vmatpush.msra.mxu0 %v374
  %485 = vmatpush.msra.mxu0 %v370
  %486 = vmatpush.msra.mxu0 %v366
  %487 = vmatpush.msra.mxu0 %v362
  %488 = vmatpush.msra.mxu0 %v358
  %489 = vmatpush.msra.mxu0 %v354
  %490 = vmatmul.f32.gmra.mxu0 %v417
  %v491 = vpop.f32.mrf.mxu0
  %v492 = vadd.f32 %v428, %v491
  %493 = vmatmul.f32.gmra.mxu0 %v418
  %v494 = vpop.f32.mrf.mxu0
  %v495 = vadd.f32 %v433, %v494
  %496 = vmatmul.f32.gmra.mxu0 %v419
  %v497 = vpop.f32.mrf.mxu0
  %v498 = vadd.f32 %v438, %v497
  %499 = vmatmul.f32.gmra.mxu0 %v420
  %v500 = vpop.f32.mrf.mxu0
  %v501 = vadd.f32 %v443, %v500
  %502 = vdwg.mxu0
  %503 = vmatpush.msra.mxu0 %v415
  %504 = vmatpush.msra.mxu0 %v411
  %505 = vmatpush.msra.mxu0 %v407
  %506 = vmatpush.msra.mxu0 %v403
  %507 = vmatpush.msra.mxu0 %v399
  %508 = vmatpush.msra.mxu0 %v395
  %509 = vmatpush.msra.mxu0 %v391
  %510 = vmatpush.msra.mxu0 %v387
  %511 = vmatpush.msra.mxu0 %v383
  %512 = vmatpush.msra.mxu0 %v379
  %513 = vmatpush.msra.mxu0 %v375
  %514 = vmatpush.msra.mxu0 %v371
  %515 = vmatpush.msra.mxu0 %v367
  %516 = vmatpush.msra.mxu0 %v363
  %517 = vmatpush.msra.mxu0 %v359
  %518 = vmatpush.msra.mxu0 %v355
  %519 = vmatmul.f32.gmra.mxu0 %v417
  %v520 = vpop.f32.mrf.mxu0
  %v521 = vadd.f32 %v428, %v520
  %522 = vmatmul.f32.gmra.mxu0 %v418
  %v523 = vpop.f32.mrf.mxu0
  %v524 = vadd.f32 %v433, %v523
  %525 = vmatmul.f32.gmra.mxu0 %v419
  %v526 = vpop.f32.mrf.mxu0
  %v527 = vadd.f32 %v438, %v526
  %528 = vmatmul.f32.gmra.mxu0 %v420
  %v529 = vpop.f32.mrf.mxu0
  %v530 = vadd.f32 %v443, %v529
  %531 = vdwg.mxu0
  %532 = vmatpush.msra.mxu0 %v416
  %533 = vmatpush.msra.mxu0 %v412
  %534 = vmatpush.msra.mxu0 %v408
  %535 = vmatpush.msra.mxu0 %v404
  %536 = vmatpush.msra.mxu0 %v400
  %537 = vmatpush.msra.mxu0 %v396
  %538 = vmatpush.msra.mxu0 %v392
  %539 = vmatpush.msra.mxu0 %v388
  %540 = vmatpush.msra.mxu0 %v384
  %541 = vmatpush.msra.mxu0 %v380
  %542 = vmatpush.msra.mxu0 %v376
  %543 = vmatpush.msra.mxu0 %v372
  %544 = vmatpush.msra.mxu0 %v368
  %545 = vmatpush.msra.mxu0 %v364
  %546 = vmatpush.msra.mxu0 %v360
  %547 = vmatpush.msra.mxu0 %v356
  %548 = vmatmul.f32.gmra.mxu0 %v417
  %v549 = vpop.f32.mrf.mxu0
  %v550 = vadd.f32 %v428, %v549
  %551 = vmatmul.f32.gmra.mxu0 %v418
  %v552 = vpop.f32.mrf.mxu0
  %v553 = vadd.f32 %v433, %v552
  %554 = vmatmul.f32.gmra.mxu0 %v419
  %v555 = vpop.f32.mrf.mxu0
  %v556 = vadd.f32 %v438, %v555
  %557 = vmatmul.f32.gmra.mxu0 %v420
  %v558 = vpop.f32.mrf.mxu0
  %v559 = vadd.f32 %v443, %v558
  %560 = vdwg.mxu0
  %v561 = vmax.f32 %v463, 0.0
  %v562 = vmax.f32 %v492, 0.0
  %v563 = vmax.f32 %v521, 0.0
  %v564 = vmax.f32 %v550, 0.0
  %v565 = vmax.f32 %v466, 0.0
  %v566 = vmax.f32 %v495, 0.0
  %v567 = vmax.f32 %v524, 0.0
  %v568 = vmax.f32 %v553, 0.0
  %v569 = vmax.f32 %v469, 0.0
  %v570 = vmax.f32 %v498, 0.0
  %v571 = vmax.f32 %v527, 0.0
  %v572 = vmax.f32 %v556, 0.0
  %v573 = vmax.f32 %v472, 0.0
  %v574 = vmax.f32 %v501, 0.0
  %v575 = vmax.f32 %v530, 0.0
  %v576 = vmax.f32 %v559, 0.0
  %v577 = vld [vmem:[%s5] sm:$0x1]
  %vm578 = vcmask 261120
  %v580 = vsel %vm578, %v577, 0
  %582 = vmatpush.msra.mxu0 0.0
  %583 = vmatpush.msra.mxu0 0.0
  %584 = vmatpush.msra.mxu0 0.0
  %585 = vmatpush.msra.mxu0 0.0
  %586 = vmatpush.msra.mxu0 0.0
  %587 = vmatpush.msra.mxu0 0.0
  %588 = vmatpush.msra.mxu0 0.0
  %589 = vmatpush.msra.mxu0 0.0
  %590 = vmatpush.msra.mxu0 0.0
  %591 = vmatpush.msra.mxu0 0.0
  %592 = vmatpush.msra.mxu0 0.0
  %593 = vmatpush.msra.mxu0 0.0
  %594 = vmatpush.msra.mxu0 %v573
  %595 = vmatpush.msra.mxu0 %v569
  %596 = vmatpush.msra.mxu0 %v565
  %597 = vmatpush.msra.mxu0 %v561
  %598 = vmatmul.f32.gmra.mxu0 %v580
  %v599 = vpop.f32.mrf.mxu0
  %v600 = vadd.f32 0.0, %v599
  %601 = vdwg.mxu0
  %602 = vmatpush.msra.mxu0 0.0
  %603 = vmatpush.msra.mxu0 0.0
  %604 = vmatpush.msra.mxu0 0.0
  %605 = vmatpush.msra.mxu0 0.0
  %606 = vmatpush.msra.mxu0 0.0
  %607 = vmatpush.msra.mxu0 0.0
  %608 = vmatpush.msra.mxu0 0.0
  %609 = vmatpush.msra.mxu0 0.0
  %610 = vmatpush.msra.mxu0 0.0
  %611 = vmatpush.msra.mxu0 0.0
  %612 = vmatpush.msra.mxu0 0.0
  %613 = vmatpush.msra.mxu0 0.0
  %614 = vmatpush.msra.mxu0 %v574
  %615 = vmatpush.msra.mxu0 %v570
  %616 = vmatpush.msra.mxu0 %v566
  %617 = vmatpush.msra.mxu0 %v562
  %618 = vmatmul.f32.gmra.mxu0 %v580
  %v619 = vpop.f32.mrf.mxu0
  %v620 = vadd.f32 0.0, %v619
  %621 = vdwg.mxu0
  %622 = vmatpush.msra.mxu0 0.0
  %623 = vmatpush.msra.mxu0 0.0
  %624 = vmatpush.msra.mxu0 0.0
  %625 = vmatpush.msra.mxu0 0.0
  %626 = vmatpush.msra.mxu0 0.0
  %627 = vmatpush.msra.mxu0 0.0
  %628 = vmatpush.msra.mxu0 0.0
  %629 = vmatpush.msra.mxu0 0.0
  %630 = vmatpush.msra.mxu0 0.0
  %631 = vmatpush.msra.mxu0 0.0
  %632 = vmatpush.msra.mxu0 0.0
  %633 = vmatpush.msra.mxu0 0.0
  %634 = vmatpush.msra.mxu0 %v575
  %635 = vmatpush.msra.mxu0 %v571
  %636 = vmatpush.msra.mxu0 %v567
  %637 = vmatpush.msra.mxu0 %v563
  %638 = vmatmul.f32.gmra.mxu0 %v580
  %v639 = vpop.f32.mrf.mxu0
  %v640 = vadd.f32 0.0, %v639
  %641 = vdwg.mxu0
  %642 = vmatpush.msra.mxu0 0.0
  %643 = vmatpush.msra.mxu0 0.0
  %644 = vmatpush.msra.mxu0 0.0
  %645 = vmatpush.msra.mxu0 0.0
  %646 = vmatpush.msra.mxu0 0.0
  %647 = vmatpush.msra.mxu0 0.0
  %648 = vmatpush.msra.mxu0 0.0
  %649 = vmatpush.msra.mxu0 0.0
  %650 = vmatpush.msra.mxu0 0.0
  %651 = vmatpush.msra.mxu0 0.0
  %652 = vmatpush.msra.mxu0 0.0
  %653 = vmatpush.msra.mxu0 0.0
  %654 = vmatpush.msra.mxu0 %v576
  %655 = vmatpush.msra.mxu0 %v572
  %656 = vmatpush.msra.mxu0 %v568
  %657 = vmatpush.msra.mxu0 %v564
  %658 = vmatmul.f32.gmra.mxu0 %v580
  %v659 = vpop.f32.mrf.mxu0
  %v660 = vadd.f32 0.0, %v659
  %661 = vdwg.mxu0
  %v666 = vrot.slane %v620, 7
  %v667 = vrot.slane %v640, 6
  %v668 = vrot.slane %v660, 5
  %vm669 = vcmask 1040384
  %v670 = vsel %vm669, %v600, %v666
  %vm671 = vcmask 1042434
  %v672 = vsel %vm671, %v667, %v668
  %vm673 = vcmask 1041408
  %v674 = vsel %vm673, %v670, %v672
  %v676 = vlaneseq
  %vm677 = vcmp.ge.s32.totalorder %v676, 0
  %vm678 = vcmp.lt.s32.totalorder %v676, 512
  %vm679 = vmand %vm677, %vm678
  %680 = vst.msk [vmem:[%s6] sm:$0xf] %vm679, %v674
  // Predicated region
  $region26: #{net_forward.1} parent=0 // pred_check
    _
  $region27: #{net_forward.1} parent=0 // pred_check_branch
    %682 = sbr.rel (0) target = $region29
  $region28: #{net_forward.1} parent=0 // pred_region
    _
  $region29: #{net_forward.1} parent=0 // pred_fallthru
    _
  // Predicated region
  $region30: #{net_forward.1} parent=0 // pred_check
    _
  $region31: #{net_forward.1} parent=0 // pred_check_branch
    %684 = sbr.rel (0) target = $region33
  $region32: #{net_forward.1} parent=0 // pred_region
    _
  $region33: #{net_forward.1} parent=0 // pred_fallthru
    _

</llo_original>
